<compile_context>
chip_gen: v7x
topology: tpu7x:2x2x1
jax: 0.10.0
libtpu: 0.0.40
codegen_flags: <defaults>
</compile_context>

<pallas_src>
import functools

import jax
import jax.numpy as jnp
from jax import lax
from jax.experimental import pallas as pl
from jax.experimental.pallas import tpu as pltpu


def _round_up(a, m):
    return ((a + m - 1) // m) * m


def _convblock_kernel(x_ref, w_ref, b_ref, o_ref, *, P):
    """Fused Conv1d(valid, stride=1) + bias + ReLU + MaxPool1d(P, P).

    x_ref: (P, K*Cin, TL)   pre-built im2col phase slabs (lane-dense, tile-aligned)
    w_ref: (Cout, K*Cin)    conv weights, tap-major rows (im2col contraction order)
    b_ref: (Cout, 1)        conv bias
    o_ref: (Cout, TL)       pooled output tile (lane-dense, unmasked stores)
    """
    acc = jnp.dot(w_ref[...], x_ref[0], preferred_element_type=jnp.float32)
    for p in range(1, P):                      # static unroll over pooling phases
        acc = jnp.maximum(
            acc, jnp.dot(w_ref[...], x_ref[p], preferred_element_type=jnp.float32))
    # Max-pool commutes with the shared bias add and the (monotone) ReLU, so
    # pooling the pre-activation phases first is exact.
    o_ref[...] = jnp.maximum(acc + b_ref[...], 0.0)


def conv_block_forward(x, w, b, pool_size=0):
    """ConvBlock.forward.

    x: (B, Cin, L) float32   (PyTorch NCL layout)
    w: (Cout, Cin, K)        (PyTorch Conv1d weight layout)
    b: (Cout,)
    returns (B, Cout, Lp), Lp = (L-K+1)//pool_size (or L-K+1 if pool_size==0).
    """
    B, Cin, L = x.shape
    Cout, _, K = w.shape
    P = pool_size if pool_size and pool_size > 1 else 1
    Lc = L - K + 1
    assert Lc >= 1, "input shorter than kernel"
    Lp = Lc // P
    assert Lp >= 1, "pooled length is zero"
    KC = K * Cin

    # Lane-dense padded pooled length and the tile size along it.
    Lp128 = _round_up(Lp, 128)
    TL = min(Lp128, 512)
    Lp_pad = _round_up(Lp, TL)
    n_lt = Lp_pad // TL

    # ---- Hoisted im2col (XLA side): per-phase, tap-major slabs --------------
    #   slab[b, p, k*Cin + c, m] = x[b, c, m*P + p + k],  m in [0, Lp)
    # Max input index read is (Lp-1)*P + (P-1) + (K-1) <= L-1, so no x padding.
    f32 = jnp.float32
    xf = x.astype(f32)
    phases = []
    for p in range(P):
        taps = [xf[:, :, p + k: p + k + (Lp - 1) * P + 1: P] for k in range(K)]
        phases.append(jnp.concatenate(taps, axis=1))        # (B, K*Cin, Lp)
    xslab = jnp.stack(phases, axis=1)                        # (B, P, K*Cin, Lp)
    if Lp_pad > Lp:
        # Zero-padded columns only produce garbage output columns that are
        # sliced away below; they never mix with valid columns.
        xslab = jnp.pad(xslab, ((0, 0), (0, 0), (0, 0), (0, Lp_pad - Lp)))

    # Conv weights as one im2col matrix, rows tap-major to match the slab rows.
    w2d = jnp.transpose(w, (0, 2, 1)).reshape(Cout, KC).astype(f32)
    b2 = b.reshape(Cout, 1).astype(f32)

    kern = functools.partial(_convblock_kernel, P=P)
    out = pl.pallas_call(
        kern,
        out_shape=jax.ShapeDtypeStruct((B, Cout, Lp_pad), f32),
        grid=(B, n_lt),
        in_specs=[
            pl.BlockSpec((pl.Squeezed(), P, KC, TL),
                         lambda bi, li: (bi, 0, 0, li)),
            pl.BlockSpec((Cout, KC), lambda bi, li: (0, 0)),
            pl.BlockSpec((Cout, 1), lambda bi, li: (0, 0)),
        ],
        out_specs=pl.BlockSpec((pl.Squeezed(), Cout, TL),
                               lambda bi, li: (bi, 0, li)),
        compiler_params=pltpu.CompilerParams(
            dimension_semantics=("parallel", "parallel")),
    )(xslab, w2d, b2)
    return out[:, :, :Lp]


def _reference(x, w, b, pool_size):
    """Pure-JAX reference for the PyTorch ConvBlock forward."""
    y = lax.conv_general_dilated(
        x, w, window_strides=(1,), padding="VALID",
        dimension_numbers=("NCH", "OIH", "NCH"))
    y = jnp.maximum(y + b.reshape(1, -1, 1), 0.0)
    if pool_size > 0:
        y = lax.reduce_window(y, -jnp.inf, lax.max,
                              (1, 1, pool_size), (1, 1, pool_size), "VALID")
    return y


if __name__ == "__main__":
    key = jax.random.PRNGKey(0)
    kx, kw, kb = jax.random.split(key, 3)

    B, Cin, Cout, K, L, P = 2, 4, 16, 5, 512, 2
    x = jax.random.normal(kx, (B, Cin, L), dtype=jnp.float32)
    w = (0.1 * jax.random.normal(kw, (Cout, Cin, K))).astype(jnp.float32)
    b = (0.1 * jax.random.normal(kb, (Cout,))).astype(jnp.float32)

    fwd_pool = jax.jit(functools.partial(conv_block_forward, pool_size=P))
    fwd_nopool = jax.jit(functools.partial(conv_block_forward, pool_size=0))

    y_pool = fwd_pool(x, w, b)
    y_nopool = fwd_nopool(x, w, b)
    jax.block_until_ready((y_pool, y_nopool))

    assert y_pool.shape == (B, Cout, (L - K + 1) // P), y_pool.shape
    assert y_nopool.shape == (B, Cout, L - K + 1), y_nopool.shape

    assert jnp.allclose(y_pool, _reference(x, w, b, P), atol=1e-3, rtol=1e-3)
    assert jnp.allclose(y_nopool, _reference(x, w, b, 0), atol=1e-3, rtol=1e-3)

    print("KERNEL_OK")
</pallas_src>

<mosaic_0001>
module attributes {stable_mosaic.version = 11 : i64} {
  func.func @_convblock_kernel(%arg0: i32, %arg1: i32, %arg2: memref<1x2x20x256xf32, #tpu.memory_space<vmem>>, %arg3: memref<16x20xf32, #tpu.memory_space<vmem>>, %arg4: memref<16x1xf32, #tpu.memory_space<vmem>>, %arg5: memref<1x16x256xf32, #tpu.memory_space<vmem>>) attributes {dimension_semantics = [#tpu.dimension_semantics<parallel>, #tpu.dimension_semantics<parallel>], iteration_bounds = array<i64: 2, 1>, scalar_prefetch = 0 : i64, scratch_operands = 0 : i64, tpu.core_type = #tpu.core_type<tc>, window_params = [{transform_indices = @transform_0, window_bounds = array<i64: 1, 2, 20, 256>}, {pipeline_mode = #tpu.pipeline_mode<synchronous>, transform_indices = @transform_1, window_bounds = array<i64: 16, 20>}, {pipeline_mode = #tpu.pipeline_mode<synchronous>, transform_indices = @transform_2, window_bounds = array<i64: 16, 1>}, {transform_indices = @transform_3, window_bounds = array<i64: 1, 16, 256>}]} {
    %c0 = arith.constant 0 : index
    %c0_0 = arith.constant 0 : index
    %0 = vector.load %arg3[%c0, %c0_0] : memref<16x20xf32, #tpu.memory_space<vmem>>, vector<16x20xf32>
    %c0_1 = arith.constant 0 : index
    %c0_2 = arith.constant 0 : index
    %c0_3 = arith.constant 0 : index
    %c0_4 = arith.constant 0 : index
    %1 = vector.load %arg2[%c0_1, %c0_2, %c0_3, %c0_4] : memref<1x2x20x256xf32, #tpu.memory_space<vmem>>, vector<1x1x20x256xf32>
    %2 = vector.shape_cast %1 : vector<1x1x20x256xf32> to vector<20x256xf32>
    %cst = arith.constant dense<0.000000e+00> : vector<16x256xf32>
    %3 = tpu.matmul %0, %2, %cst {dimension_numbers = #tpu.dot_dimension_numbers<[1], [0], [0], [1], [0, 0, 1, 1], [], []>} : vector<16x20xf32>, vector<20x256xf32>, vector<16x256xf32> -> vector<16x256xf32>
    %c0_5 = arith.constant 0 : index
    %c0_6 = arith.constant 0 : index
    %4 = vector.load %arg3[%c0_5, %c0_6] : memref<16x20xf32, #tpu.memory_space<vmem>>, vector<16x20xf32>
    %c0_7 = arith.constant 0 : index
    %c1 = arith.constant 1 : index
    %c0_8 = arith.constant 0 : index
    %c0_9 = arith.constant 0 : index
    %5 = vector.load %arg2[%c0_7, %c1, %c0_8, %c0_9] : memref<1x2x20x256xf32, #tpu.memory_space<vmem>>, vector<1x1x20x256xf32>
    %6 = vector.shape_cast %5 : vector<1x1x20x256xf32> to vector<20x256xf32>
    %cst_10 = arith.constant dense<0.000000e+00> : vector<16x256xf32>
    %7 = tpu.matmul %4, %6, %cst_10 {dimension_numbers = #tpu.dot_dimension_numbers<[1], [0], [0], [1], [0, 0, 1, 1], [], []>} : vector<16x20xf32>, vector<20x256xf32>, vector<16x256xf32> -> vector<16x256xf32>
    %8 = arith.maximumf %3, %7 : vector<16x256xf32>
    %c0_11 = arith.constant 0 : index
    %c0_12 = arith.constant 0 : index
    %9 = vector.load %arg4[%c0_11, %c0_12] : memref<16x1xf32, #tpu.memory_space<vmem>>, vector<16x1xf32>
    %10 = vector.broadcast %9 : vector<16x1xf32> to vector<16x256xf32>
    %11 = arith.addf %8, %10 : vector<16x256xf32>
    %cst_13 = arith.constant 0.000000e+00 : f32
    %12 = vector.broadcast %cst_13 : f32 to vector<16x256xf32>
    %13 = arith.maximumf %11, %12 : vector<16x256xf32>
    %c0_14 = arith.constant 0 : index
    %c0_15 = arith.constant 0 : index
    %c0_16 = arith.constant 0 : index
    %14 = vector.load %arg5[%c0_14, %c0_15, %c0_16] : memref<1x16x256xf32, #tpu.memory_space<vmem>>, vector<1x16x256xf32>
    %15 = vector.shape_cast %14 : vector<1x16x256xf32> to vector<16x256xf32>
    %16 = vector.shape_cast %13 : vector<16x256xf32> to vector<1x16x256xf32>
    tpu.vector_store %arg5[%c0_14, %c0_15, %c0_16], %16 {strides = array<i32>} : memref<1x16x256xf32, #tpu.memory_space<vmem>>, vector<1x16x256xf32>,
    return
  }
  func.func @transform_0(%arg0: i32, %arg1: i32) -> (i32, i32, i32, i32) {
    %c0_i32 = arith.constant 0 : i32
    %c0_i32_0 = arith.constant 0 : i32
    %c0_i32_1 = arith.constant 0 : i32
    return %arg0, %c0_i32, %c0_i32_0, %arg1 : i32, i32, i32, i32
  }
  func.func @transform_1(%arg0: i32, %arg1: i32) -> (i32, i32) {
    %c0_i32 = arith.constant 0 : i32
    %c0_i32_0 = arith.constant 0 : i32
    %c0_i32_1 = arith.constant 0 : i32
    return %c0_i32, %c0_i32_0 : i32, i32
  }
  func.func @transform_2(%arg0: i32, %arg1: i32) -> (i32, i32) {
    %c0_i32 = arith.constant 0 : i32
    %c0_i32_0 = arith.constant 0 : i32
    %c0_i32_1 = arith.constant 0 : i32
    return %c0_i32, %c0_i32_0 : i32, i32
  }
  func.func @transform_3(%arg0: i32, %arg1: i32) -> (i32, i32, i32) {
    %c0_i32 = arith.constant 0 : i32
    %c0_i32_0 = arith.constant 0 : i32
    return %arg0, %c0_i32, %arg1 : i32, i32, i32
  }
}

</mosaic_0001>

<llo_original>
// kernel: conv_block_forward.1
$region0: #{conv_block_forward.1}
  #allocation0 [shape = 'u32[]', space=smem, size = 0x4, offset = 0x4, fixed_abs, tag = 'smem constant byte address 0x4 - core index']
  #allocation1 [shape = 'u32[144,128]{1,0:T(1,128)}', space=vmem, size = 0x12000, scoped, tag = 'internal scratch']
  %s0 = inlined_call_operand.vmem [shape: f32[2,2,20,256], index: 0, kind: input, shape index: {}]
  %s1 = inlined_call_operand.vmem [shape: f32[16,20], index: 1, kind: input, shape index: {}]
  %s2 = inlined_call_operand.vmem [shape: f32[16,1], index: 2, kind: input, shape index: {}]
  %s3 = inlined_call_operand.hbm [shape: f32[2,16,256], index: 3, kind: output, shape index: {}]
  %s4 = sld [smem:[#allocation0]]
  $region45: #{conv_block_forward.1} parent=0
    _
  %s6 = ssub.s32 1, %s4
  %s7 = scalar_select 0, %s6, %s4
  $region1: #{conv_block_forward.1} parent=0
    #allocation2 [shape = 'u8[32768]{0}', space=vmem, size = 0x8000, scoped, tag = 'output window, operand 0']
    #allocation3 [shape = 's32[2]{0}', space=sflag, size = 0x8, scoped, tag = 'scoped memory for conv_block_forward.1']
    %8 = vsyncpa [#allocation3], 0
    %s9 = scalar_lea.sflag [#allocation3], 1
    %10 = vsyncpa %s9, 0
    loop: start=0, step=1, limit=4
    $region2: #{conv_block_forward.1} parent=1 // loop_pre_header
      _
    $region3: #{conv_block_forward.1} parent=1 // loop_header
      %s12 = sphi 0, %s16
      %p13 = scmp.ge.s32.totalorder %s12, 4
      %s19 = sphi 0, %s31
      %s20 = sphi 0, %s27
      %s21 = sphi 0, %s19
      %s22 = sphi 0, %s20
      %s23 = sphi 0, %s21
      %s24 = sphi 0, %s22
      %s36 = sphi 0, %s38
      %s39 = sphi 0, %s36
      %s40 = sphi 0, %s39
      %s56 = sphi 0, %s40
      %s60 = sphi 0, %s60
      %s62 = sphi 0, %s60
      %s63 = sphi 0, %s62
      %s77 = sphi 0, %s63
      %s81 = sphi 0, %s81
      %s83 = sphi 0, %s81
      %s84 = sphi 0, %s83
      %s98 = sphi 0, %s84
      %s106 = sphi 0, %s108
      %s109 = sphi 0, %s106
      %s110 = sphi 0, %s109
      %s126 = sphi 0, %s110
    $region4: #{conv_block_forward.1} parent=1 // loop_header_branch
      %15 = sbr.rel (%p13) target = $region8
    $region5: #{conv_block_forward.1} parent=1 // loop_body
      %s17 = ssub.s32 %s12, 1
      %s18 = ssub.s32 %s12, 2
      %s25 = sadd.s32 1, %s20
      %p26 = scmp.ge.s32.totalorder %s25, 1
      %s27 = scalar_select %p26, 0, %s25
      %s28 = sadd.s32 1, %s19
      %s29 = scalar_select %p26, %s28, %s19
      %p30 = scmp.ge.s32.totalorder %s29, 2
      %s31 = scalar_select %p30, 0, %s29
      %s32 = ssub.s32 %s19, %s31
      %s33 = ssub.s32 %s20, %s27
      %s34 = sor.u32 %s32, %s33
      %p35 = scmp.eq.s32.totalorder %s34, 0
      %s37 = sadd.s32 %s36, 1
      %s38 = scalar_select %p35, %s36, %s37
      %p41 = pneg %p35
      %p42 = scmp.eq.s32.totalorder %s12, 1
      %p43 = por %p41, %p42
      %p44 = scmp.ne.s32.totalorder %s36, %s39
      %p45 = scmp.eq.s32.totalorder %s12, 0
      %p46 = por %p44, %p45
      %p47 = scmp.ne.s32.totalorder %s36, %s39
      %p48 = scmp.eq.s32.totalorder %s17, 1
      %p49 = por %p47, %p48
      %p50 = scmp.ne.s32.totalorder %s39, %s40
      %p51 = scmp.eq.s32.totalorder %s17, 0
      %p52 = por %p50, %p51
      %p53 = scmp.ne.s32.totalorder %s39, %s40
      %p54 = scmp.eq.s32.totalorder %s18, 1
      %p55 = por %p53, %p54
      %p57 = scmp.ne.s32.totalorder %s40, %s56
      %p58 = scmp.eq.s32.totalorder %s18, 0
      %p59 = por %p57, %p58
      %s61 = sadd.s32 %s60, 1
      %p64 = scmp.eq.s32.totalorder %s12, 1
      %p65 = scmp.ne.s32.totalorder %s60, %s62
      %p66 = scmp.eq.s32.totalorder %s12, 0
      %p67 = por %p65, %p66
      %p68 = scmp.ne.s32.totalorder %s60, %s62
      %p69 = scmp.eq.s32.totalorder %s17, 1
      %p70 = por %p68, %p69
      %p71 = scmp.ne.s32.totalorder %s62, %s63
      %p72 = scmp.eq.s32.totalorder %s17, 0
      %p73 = por %p71, %p72
      %p74 = scmp.ne.s32.totalorder %s62, %s63
      %p75 = scmp.eq.s32.totalorder %s18, 1
      %p76 = por %p74, %p75
      %p78 = scmp.ne.s32.totalorder %s63, %s77
      %p79 = scmp.eq.s32.totalorder %s18, 0
      %p80 = por %p78, %p79
      %s82 = sadd.s32 %s81, 1
      %p85 = scmp.eq.s32.totalorder %s12, 1
      %p86 = scmp.ne.s32.totalorder %s81, %s83
      %p87 = scmp.eq.s32.totalorder %s12, 0
      %p88 = por %p86, %p87
      %p89 = scmp.ne.s32.totalorder %s81, %s83
      %p90 = scmp.eq.s32.totalorder %s17, 1
      %p91 = por %p89, %p90
      %p92 = scmp.ne.s32.totalorder %s83, %s84
      %p93 = scmp.eq.s32.totalorder %s17, 0
      %p94 = por %p92, %p93
      %p95 = scmp.ne.s32.totalorder %s83, %s84
      %p96 = scmp.eq.s32.totalorder %s18, 1
      %p97 = por %p95, %p96
      %p99 = scmp.ne.s32.totalorder %s84, %s98
      %p100 = scmp.eq.s32.totalorder %s18, 0
      %p101 = por %p99, %p100
      %s102 = ssub.s32 %s19, %s31
      %s103 = ssub.s32 %s20, %s27
      %s104 = sor.u32 %s102, %s103
      %p105 = scmp.eq.s32.totalorder %s104, 0
      %s107 = sadd.s32 %s106, 1
      %s108 = scalar_select %p105, %s106, %s107
      %p111 = pneg %p105
      %p112 = scmp.eq.s32.totalorder %s12, 1
      %p113 = por %p111, %p112
      %p114 = scmp.ne.s32.totalorder %s106, %s109
      %p115 = scmp.eq.s32.totalorder %s12, 0
      %p116 = por %p114, %p115
      %p117 = scmp.ne.s32.totalorder %s106, %s109
      %p118 = scmp.eq.s32.totalorder %s17, 1
      %p119 = por %p117, %p118
      %p120 = scmp.ne.s32.totalorder %s109, %s110
      %p121 = scmp.eq.s32.totalorder %s17, 0
      %p122 = por %p120, %p121
      %p123 = scmp.ne.s32.totalorder %s109, %s110
      %p124 = scmp.eq.s32.totalorder %s18, 1
      %p125 = por %p123, %p124
      %p127 = scmp.ne.s32.totalorder %s110, %s126
      %p128 = scmp.eq.s32.totalorder %s18, 0
      %p129 = por %p127, %p128
      %p130 = scmp.le.s32.totalorder 1, %s12
      %p131 = scmp.lt.s32.totalorder %s12, 3
      %p132 = pnand %p130, %p131
      %p133 = pneg %p132
      // Predicated region
      $region9: #{conv_block_forward.1} parent=5 // pred_check
        _
      $region10: #{conv_block_forward.1} parent=5 // pred_check_branch
        %135 = sbr.rel (%p132) target = $region12
      $region11: #{conv_block_forward.1} parent=5 // pred_region
        %s136 = ssub.s32 %s12, 1
        // Predicated region
        $region13: #{conv_block_forward.1} parent=11 // pred_check
          %p137 = pneg %p73
        $region14: #{conv_block_forward.1} parent=11 // pred_check_branch
          %139 = sbr.rel (%p137) target = $region16
        $region15: #{conv_block_forward.1} parent=11 // pred_region
          _
        $region16: #{conv_block_forward.1} parent=11 // pred_fallthru
          _
        // Predicated region
        $region17: #{conv_block_forward.1} parent=11 // pred_check
          %p140 = pneg %p94
        $region18: #{conv_block_forward.1} parent=11 // pred_check_branch
          %142 = sbr.rel (%p140) target = $region20
        $region19: #{conv_block_forward.1} parent=11 // pred_region
          _
        $region20: #{conv_block_forward.1} parent=11 // pred_fallthru
          _
      $region12: #{conv_block_forward.1} parent=5 // pred_fallthru
        _
      %p143 = scmp.lt.s32.totalorder %s12, 2
      // Predicated region
      $region21: #{conv_block_forward.1} parent=5 // pred_check
        %p144 = pneg %p143
      $region22: #{conv_block_forward.1} parent=5 // pred_check_branch
        %146 = sbr.rel (%p144) target = $region24
      $region23: #{conv_block_forward.1} parent=5 // pred_region
        // Predicated region
        $region25: #{conv_block_forward.1} parent=23 // pred_check
          %p147 = pneg %p46
        $region26: #{conv_block_forward.1} parent=23 // pred_check_branch
          %149 = sbr.rel (%p147) target = $region28
        $region27: #{conv_block_forward.1} parent=23 // pred_region
          %s150 = smul.u32 2, %s20
          %p151 = scmp.lt.s32.totalorder %s19, 1
          %s152 = scalar_select %p151, %s19, 1
          %p153 = scmp.lt.s32.totalorder %s150, 1
          %s154 = scalar_select %p153, %s150, 1
          %s155 = smul.addr %s152, 12
          %s156 = sadd.s32 %s154, %s155
          %s157 = smul.addr %s156, 8
          %s158 = scalar_lea.vmem %s0, %s157
          %s159 = smul.u32 2, %s20
        $region28: #{conv_block_forward.1} parent=23 // pred_fallthru
          _
      $region24: #{conv_block_forward.1} parent=5 // pred_fallthru
        _
      %p160 = scmp.le.s32.totalorder 1, %s12
      %p161 = scmp.lt.s32.totalorder %s12, 3
      %p162 = pnand %p160, %p161
      %p163 = pneg %p162
      // Predicated region
      $region29: #{conv_block_forward.1} parent=5 // pred_check
        _
      $region30: #{conv_block_forward.1} parent=5 // pred_check_branch
        %165 = sbr.rel (%p162) target = $region32
      $region31: #{conv_block_forward.1} parent=5 // pred_region
        %s166 = ssub.s32 %s12, 1
        %s167 = smul.u32 2, %s22
        %p168 = scmp.lt.s32.totalorder %s21, 1
        %s169 = scalar_select %p168, %s21, 1
        %p170 = scmp.lt.s32.totalorder %s167, 1
        %s171 = scalar_select %p170, %s167, 1
        %s172 = smul.addr %s169, 12
        %s173 = sadd.s32 %s171, %s172
        %s174 = smul.addr %s173, 8
        %s175 = scalar_lea.vmem %s0, %s174
        %p176 = pneg %p52
        %p177 = pneg %p49
        %p178 = pneg %p73
        %p179 = pneg %p70
        %p180 = pneg %p94
        %p181 = pneg %p91
        %p182 = pneg %p122
        %p183 = pneg %p119
        %s184 = sand.u32 %s109, 1
        %s185 = scalar_lea.sflag [#allocation3], %s184
        %s186 = sand.u32 %s109, 1
        %s187 = smul.addr %s186, 32
        %s188 = scalar_lea.vmem [#allocation2], %s187
        %s189 = smul.u32 2, %s22
        %p190 = scmp.lt.s32.totalorder %s21, 1
        %s191 = scalar_select %p190, %s21, 1
        %p192 = scmp.lt.s32.totalorder %s189, 1
        %s193 = scalar_select %p192, %s189, 1
        %s194 = smul.addr %s191, 12
        %s195 = sadd.s32 %s193, %s194
        %s196 = smul.addr %s195, 8
        %s197 = scalar_lea.vmem %s0, %s196
        %s198 = smul.u32 2, %s22
        %s199 = smul.u32 2, %s22
        %v200 = vld [vmem:[%s1] sm:$0xff]
        %v201 = vld [vmem:[%s1 + $0x8] sm:$0xff]
        %v202 = vld [vmem:[%s197] sm:$0xff]
        %v203 = vld [vmem:[%s197 + $0x8] sm:$0xff]
        %v204 = vld [vmem:[%s197 + $0x10] sm:$0xff]
        %v205 = vld [vmem:[%s197 + $0x18] sm:$0xff]
        %v206 = vld [vmem:[%s197 + $0x20] sm:$0xf]
        %v207 = vld [vmem:[%s197 + $0x28] sm:$0xf]
        %vm208 = vcmask 162816
        %v210 = vsel %vm208, %v200, 0
        %v213 = vsel %vm208, %v201, 0
        %vm215 = vcmask 1043456
        %v217 = vsel %vm215, %v206, 0
        %v220 = vsel %vm215, %v207, 0
        %222 = vmatprep.subr.mxu0 %v203
        %223 = vmatpush1.msra.mxu0 %v202
        %224 = vmatprep.subr.mxu0 %v205
        %225 = vmatpush1.msra.mxu0 %v204
        %226 = vmatprep.subr.mxu0 %v220
        %227 = vmatpush1.msra.mxu0 %v217
        %228 = vmatprep.subr.mxu0 0.0
        %229 = vmatpush1.msra.mxu0 0.0
        %230 = vmatprep.subr.mxu0 0.0
        %231 = vmatpush1.msra.mxu0 0.0
        %232 = vmatprep.subr.mxu0 0.0
        %233 = vmatpush1.msra.mxu0 0.0
        %234 = vmatprep.subr.mxu0 0.0
        %235 = vmatpush1.msra.mxu0 0.0
        %236 = vmatprep.subr.mxu0 0.0
        %237 = vmatpush1.msra.mxu0 0.0
        %238 = vmatprep.subr.mxu0 0.0
        %239 = vmatpush1.msra.mxu0 0.0
        %240 = vmatprep.subr.mxu0 0.0
        %241 = vmatpush1.msra.mxu0 0.0
        %242 = vmatprep.subr.mxu0 0.0
        %243 = vmatpush1.msra.mxu0 0.0
        %244 = vmatprep.subr.mxu0 0.0
        %245 = vmatpush1.msra.mxu0 0.0
        %246 = vmatprep.subr.mxu0 0.0
        %247 = vmatpush1.msra.mxu0 0.0
        %248 = vmatprep.subr.mxu0 0.0
        %249 = vmatpush1.msra.mxu0 0.0
        %250 = vmatprep.subr.mxu0 0.0
        %251 = vmatpush1.msra.mxu0 0.0
        %252 = vmatprep.subr.mxu0 0.0
        %253 = vmatpush1.msra.mxu0 0.0
        %254 = vmatprep.subr.mxu0 0.0
        %255 = vmatpush1.msra.mxu0 0.0
        %256 = vmatprep.subr.mxu0 0.0
        %257 = vmatpush1.msra.mxu0 0.0
        %258 = vmatprep.subr.mxu0 0.0
        %259 = vmatpush1.msra.mxu0 0.0
        %260 = vmatprep.subr.mxu0 0.0
        %261 = vmatpush1.msra.mxu0 0.0
        %262 = vmatprep.subr.mxu0 0.0
        %263 = vmatpush1.msra.mxu0 0.0
        %264 = vmatprep.subr.mxu0 0.0
        %265 = vmatpush1.msra.mxu0 0.0
        %266 = vmatprep.subr.mxu0 0.0
        %267 = vmatpush1.msra.mxu0 0.0
        %268 = vmatprep.subr.mxu0 0.0
        %269 = vmatpush1.msra.mxu0 0.0
        %270 = vmatprep.subr.mxu0 0.0
        %271 = vmatpush1.msra.mxu0 0.0
        %272 = vmatprep.subr.mxu0 0.0
        %273 = vmatpush1.msra.mxu0 0.0
        %274 = vmatprep.subr.mxu0 0.0
        %275 = vmatpush1.msra.mxu0 0.0
        %276 = vmatprep.subr.mxu0 0.0
        %277 = vmatpush1.msra.mxu0 0.0
        %278 = vmatprep.subr.mxu0 0.0
        %279 = vmatpush1.msra.mxu0 0.0
        %280 = vmatprep.subr.mxu0 0.0
        %281 = vmatpush1.msra.mxu0 0.0
        %282 = vmatprep.subr.mxu0 0.0
        %283 = vmatpush1.msra.mxu0 0.0
        %284 = vmatprep.subr.mxu0 0.0
        %285 = vmatpush1.msra.mxu0 0.0
        %286 = vmatprep.mubr.f32.mxu0 0.0
        %287 = vmatmul.mubr.f32.gmra.mrb[0].mxu0 %v210
        %v288 = vpop.f32.mrb[0].mxu0
        %v289 = vadd.f32 0.0, %v288
        %v290 = vpop.f32.mrb[0].mxu0
        %v291 = vadd.f32 0.0, %v290
        %292 = vmatprep.mubr.f32.mxu0 0.0
        %293 = vmatmul.mubr.f32.gmra.mrb[0].mxu0 %v213
        %v294 = vpop.f32.mrb[0].mxu0
        %v295 = vadd.f32 0.0, %v294
        %v296 = vpop.f32.mrb[0].mxu0
        %v297 = vadd.f32 0.0, %v296
        %298 = vdwg.mxu0
        %s299 = scalar_lea.vmem %s197, 48
        %v300 = vld [vmem:[%s299] sm:$0xff]
        %v301 = vld [vmem:[%s299 + $0x8] sm:$0xff]
        %v302 = vld [vmem:[%s299 + $0x10] sm:$0xff]
        %v303 = vld [vmem:[%s299 + $0x18] sm:$0xff]
        %v304 = vld [vmem:[%s299 + $0x20] sm:$0xf]
        %v305 = vld [vmem:[%s299 + $0x28] sm:$0xf]
        %v307 = vsel %vm215, %v304, 0
        %v310 = vsel %vm215, %v305, 0
        %312 = vmatprep.subr.mxu0 %v301
        %313 = vmatpush1.msra.mxu0 %v300
        %314 = vmatprep.subr.mxu0 %v303
        %315 = vmatpush1.msra.mxu0 %v302
        %316 = vmatprep.subr.mxu0 %v310
        %317 = vmatpush1.msra.mxu0 %v307
        %318 = vmatprep.subr.mxu0 0.0
        %319 = vmatpush1.msra.mxu0 0.0
        %320 = vmatprep.subr.mxu0 0.0
        %321 = vmatpush1.msra.mxu0 0.0
        %322 = vmatprep.subr.mxu0 0.0
        %323 = vmatpush1.msra.mxu0 0.0
        %324 = vmatprep.subr.mxu0 0.0
        %325 = vmatpush1.msra.mxu0 0.0
        %326 = vmatprep.subr.mxu0 0.0
        %327 = vmatpush1.msra.mxu0 0.0
        %328 = vmatprep.subr.mxu0 0.0
        %329 = vmatpush1.msra.mxu0 0.0
        %330 = vmatprep.subr.mxu0 0.0
        %331 = vmatpush1.msra.mxu0 0.0
        %332 = vmatprep.subr.mxu0 0.0
        %333 = vmatpush1.msra.mxu0 0.0
        %334 = vmatprep.subr.mxu0 0.0
        %335 = vmatpush1.msra.mxu0 0.0
        %336 = vmatprep.subr.mxu0 0.0
        %337 = vmatpush1.msra.mxu0 0.0
        %338 = vmatprep.subr.mxu0 0.0
        %339 = vmatpush1.msra.mxu0 0.0
        %340 = vmatprep.subr.mxu0 0.0
        %341 = vmatpush1.msra.mxu0 0.0
        %342 = vmatprep.subr.mxu0 0.0
        %343 = vmatpush1.msra.mxu0 0.0
        %344 = vmatprep.subr.mxu0 0.0
        %345 = vmatpush1.msra.mxu0 0.0
        %346 = vmatprep.subr.mxu0 0.0
        %347 = vmatpush1.msra.mxu0 0.0
        %348 = vmatprep.subr.mxu0 0.0
        %349 = vmatpush1.msra.mxu0 0.0
        %350 = vmatprep.subr.mxu0 0.0
        %351 = vmatpush1.msra.mxu0 0.0
        %352 = vmatprep.subr.mxu0 0.0
        %353 = vmatpush1.msra.mxu0 0.0
        %354 = vmatprep.subr.mxu0 0.0
        %355 = vmatpush1.msra.mxu0 0.0
        %356 = vmatprep.subr.mxu0 0.0
        %357 = vmatpush1.msra.mxu0 0.0
        %358 = vmatprep.subr.mxu0 0.0
        %359 = vmatpush1.msra.mxu0 0.0
        %360 = vmatprep.subr.mxu0 0.0
        %361 = vmatpush1.msra.mxu0 0.0
        %362 = vmatprep.subr.mxu0 0.0
        %363 = vmatpush1.msra.mxu0 0.0
        %364 = vmatprep.subr.mxu0 0.0
        %365 = vmatpush1.msra.mxu0 0.0
        %366 = vmatprep.subr.mxu0 0.0
        %367 = vmatpush1.msra.mxu0 0.0
        %368 = vmatprep.subr.mxu0 0.0
        %369 = vmatpush1.msra.mxu0 0.0
        %370 = vmatprep.subr.mxu0 0.0
        %371 = vmatpush1.msra.mxu0 0.0
        %372 = vmatprep.subr.mxu0 0.0
        %373 = vmatpush1.msra.mxu0 0.0
        %374 = vmatprep.subr.mxu0 0.0
        %375 = vmatpush1.msra.mxu0 0.0
        %376 = vmatprep.mubr.f32.mxu0 0.0
        %377 = vmatmul.mubr.f32.gmra.mrb[0].mxu0 %v210
        %v378 = vpop.f32.mrb[0].mxu0
        %v379 = vadd.f32 0.0, %v378
        %v380 = vpop.f32.mrb[0].mxu0
        %v381 = vadd.f32 0.0, %v380
        %382 = vmatprep.mubr.f32.mxu0 0.0
        %383 = vmatmul.mubr.f32.gmra.mrb[0].mxu0 %v213
        %v384 = vpop.f32.mrb[0].mxu0
        %v385 = vadd.f32 0.0, %v384
        %v386 = vpop.f32.mrb[0].mxu0
        %v387 = vadd.f32 0.0, %v386
        %388 = vdwg.mxu0
        %v389 = vmax.f32 %v289, %v379
        %v390 = vmax.f32 %v291, %v381
        %v391 = vmax.f32 %v295, %v385
        %v392 = vmax.f32 %v297, %v387
        %v393 = vld [vmem:[%s2] sm:$0xff]
        %v394 = vld [vmem:[%s2 + $0x8] sm:$0xff]
        %396 = vset.pattern.permute.xlu0 0
        %397 = vperm.xlu0 %396, %v393
        %v398 = vpop.permute.xlu0 %397
        %401 = vset.pattern.permute.xlu0 0
        %402 = vperm.xlu0 %401, %v394
        %v403 = vpop.permute.xlu0 %402
        %v405 = vadd.f32 %v389, %v398
        %v406 = vadd.f32 %v390, %v398
        %v407 = vadd.f32 %v391, %v403
        %v408 = vadd.f32 %v392, %v403
        %v409 = vmax.f32 %v405, 0.0
        %v410 = vmax.f32 %v406, 0.0
        %v411 = vmax.f32 %v407, 0.0
        %v412 = vmax.f32 %v408, 0.0
        %413 = vst [vmem:[%s188] sm:$0xff] %v409
        %414 = vst [vmem:[%s188 + $0x8] sm:$0xff] %v410
        %415 = vst [vmem:[%s188 + $0x10] sm:$0xff] %v411
        %416 = vst [vmem:[%s188 + $0x18] sm:$0xff] %v412
        %s417 = sand.u32 %s109, 1
        %s418 = scalar_lea.sflag [#allocation3], %s417
        %s419 = sand.u32 %s109, 1
        %s420 = smul.addr %s419, 32
        %s421 = scalar_lea.vmem [#allocation2], %s420
        // Predicated region
        $region33: #{conv_block_forward.1} parent=31 // pred_check
          %p422 = pneg %p119
        $region34: #{conv_block_forward.1} parent=31 // pred_check_branch
          %424 = sbr.rel (%p422) target = $region36
        $region35: #{conv_block_forward.1} parent=31 // pred_region
          %s425 = smul.u32 2, %s22
          %s427 = ssub.s32 512, 512
          %428 = vsyncadd %s418, %s427
          %s429 = smul.addr %s21, 4
          %s430 = sadd.s32 %s425, %s429
          %s431 = smul.addr %s430, 128
          %s432 = scalar_lea.hbm %s3, %s431
          %s433 = sshll.u32 %s421, 4
          %s434 = int_to_ptr.vmem [resolvable:$true] %s433
          %439 = dma.vmem_to_hbm [thread:$0]  %s434, 512, %s432, %s418, 256, 256, 16
        $region36: #{conv_block_forward.1} parent=31 // pred_fallthru
          _
      $region32: #{conv_block_forward.1} parent=5 // pred_fallthru
        _
      %p440 = scmp.le.s32.totalorder 2, %s12
      // Predicated region
      $region37: #{conv_block_forward.1} parent=5 // pred_check
        %p441 = pneg %p440
      $region38: #{conv_block_forward.1} parent=5 // pred_check_branch
        %443 = sbr.rel (%p441) target = $region40
      $region39: #{conv_block_forward.1} parent=5 // pred_region
        %s444 = ssub.s32 %s12, 2
        // Predicated region
        $region41: #{conv_block_forward.1} parent=39 // pred_check
          %p445 = pneg %p125
        $region42: #{conv_block_forward.1} parent=39 // pred_check_branch
          %447 = sbr.rel (%p445) target = $region44
        $region43: #{conv_block_forward.1} parent=39 // pred_region
          %s448 = sand.u32 %s110, 1
          %s449 = scalar_lea.sflag [#allocation3], %s448
          %s450 = sand.u32 %s110, 1
          %s451 = smul.addr %s450, 32
          %s452 = scalar_lea.vmem [#allocation2], %s451
          %453 = dma.done %s449, 512
        $region44: #{conv_block_forward.1} parent=39 // pred_fallthru
          _
      $region40: #{conv_block_forward.1} parent=5 // pred_fallthru
        _
    $region6: #{conv_block_forward.1} parent=1 // loop_footer
      %s16 = sadd.s32 1, %s12
    $region7: #{conv_block_forward.1} parent=1 // loop_footer_branch
      %11 = sbr.rel target = $region3
    $region8: #{conv_block_forward.1} parent=1 // loop_exit
      _
    %454 = vsyncpa [#allocation3], 1
    %s455 = scalar_lea.sflag [#allocation3], 1
    %456 = vsyncpa %s455, 1

</llo_original>
